<compile_context>
chip_gen: v5e
topology: v5e:2x2
jax: 0.10.0
libtpu: 0.0.40
codegen_flags: <defaults>
</compile_context>

<pallas_src>
import functools
import math

import jax
import jax.numpy as jnp
from jax.experimental import pallas as pl
from jax.experimental.pallas import tpu as pltpu


def _dice_accum_kernel(x_ref, y_ref, acc_ref, *, tm, rows_total,
                       blocks_per_shard, needs_mask):
    """Accumulate per-lane partial sums of x*y, x, y over row tiles.

    acc_ref block: (1, 3, 8, W) resident accumulator for this core shard:
      acc[0,0] = sum(x*y), acc[0,1] = sum(x), acc[0,2] = sum(y),
    each kept as (8, W) sublane partials (cross-sublane reduce happens once,
    outside the kernel).
    """
    s = pl.program_id(0)          # core / parallel shard
    i = pl.program_id(1)          # row-tile index within the shard

    @pl.when(i == 0)
    def _init():
        acc_ref[...] = jnp.zeros_like(acc_ref)

    def accum(x, y):
        x = x.astype(jnp.float32)
        y = y.astype(jnp.float32)
        w = x.shape[-1]
        xr = x.reshape(tm // 8, 8, w)
        yr = y.reshape(tm // 8, 8, w)
        xy = xr * yr
        # Plain VPU vreg adds; no per-step cross-sublane (XLU) reduction.
        acc_ref[0, 0] += xy.sum(axis=0)
        acc_ref[0, 1] += xr.sum(axis=0)
        acc_ref[0, 2] += yr.sum(axis=0)

    if not needs_mask:
        accum(x_ref[...], y_ref[...])
    else:
        b = s * blocks_per_shard + i          # logical row-tile index
        full_blocks = rows_total // tm        # statically known

        @pl.when(b < full_blocks)
        def _full():
            accum(x_ref[...], y_ref[...])

        @pl.when(b >= full_blocks)
        def _tail():
            w = x_ref.shape[-1]
            limit = rows_total - b * tm       # rows actually valid in this tile
            rows = jax.lax.broadcasted_iota(jnp.int32, (tm, w), 0)
            msk = rows < limit
            xm = jnp.where(msk, x_ref[...].astype(jnp.float32), 0.0)
            ym = jnp.where(msk, y_ref[...].astype(jnp.float32), 0.0)
            accum(xm, ym)


def _num_tensorcores():
    """2 only on v7x (2 TC/chip); v5e/v6e are single-TC so sharding just adds
    overhead there."""
    try:
        kind = jax.devices()[0].device_kind.lower()
        if "v7" in kind:
            return 2
    except Exception:
        pass
    return 1


def dice_loss(inputs, targets, smooth=1.0, *, tm=None, num_shards=None,
              block_bytes=2 * 1024 * 1024):
    """Pallas DiceLoss forward. inputs/targets: any (identical) shape; all
    leading dims are reduced, the last dim is the class axis."""
    assert inputs.shape == targets.shape
    c = inputs.shape[-1]
    total = 1
    for d in inputs.shape:
        total *= d

    itemsize = max(jnp.dtype(inputs.dtype).itemsize,
                   jnp.dtype(targets.dtype).itemsize)
    sub = {1: 32, 2: 16}.get(itemsize, 8)   # sublane-pack multiple per dtype

    # ---- choose a lane-dense layout ------------------------------------
    if c % 128 == 0:
        # Rows are already lane-dense; full-last-dim blocks.
        w, fold = c, 1
        x = inputs.reshape(-1, c)
        y = targets.reshape(-1, c)
    elif c < 128:
        # Fold to W = lcm(c, 128): every vreg lane carries real data and the
        # class of lane l is l % c, so the epilogue is a cheap lane fold.
        w = (c * 128) // math.gcd(c, 128)
        fold = w // c
        x = inputs.reshape(-1)
        y = targets.reshape(-1)
        if total % w != 0:
            # Zero padding is exact: contributes 0 to all three sums.
            pad = w - (total % w)
            x = jnp.pad(x, (0, pad))
            y = jnp.pad(y, (0, pad))
        x = x.reshape(-1, w)
        y = y.reshape(-1, w)
    else:
        # c > 128 and not a multiple of 128: full-last-dim blocks (legal;
        # at worst <2x lane padding).
        w, fold = c, 1
        x = inputs.reshape(-1, c)
        y = targets.reshape(-1, c)
    m = x.shape[0]

    # ---- row tile: ~block_bytes per input block, sublane-aligned --------
    if tm is None:
        tm = max(sub, block_bytes // (w * itemsize))
    tm_eff = min(tm, pl.cdiv(m, sub) * sub)
    tm_eff = max(sub, (tm_eff // sub) * sub)

    nblocks = pl.cdiv(m, tm_eff)

    # ---- shard across TensorCores only when it is free ------------------
    if num_shards is None:
        num_shards = _num_tensorcores()
    num_shards = max(1, min(num_shards, nblocks))
    if nblocks % num_shards != 0:
        num_shards = 1                    # avoid phantom-block re-reads
    bpc = nblocks // num_shards
    needs_mask = (m % tm_eff) != 0

    def in_map(s, i):
        # Clamp is defensive only (no phantom blocks by construction).
        return (jnp.minimum(s * bpc + i, nblocks - 1), 0)

    kernel = functools.partial(
        _dice_accum_kernel, tm=tm_eff, rows_total=m,
        blocks_per_shard=bpc, needs_mask=needs_mask)

    acc = pl.pallas_call(
        kernel,
        out_shape=jax.ShapeDtypeStruct((num_shards, 3, 8, w), jnp.float32),
        grid_spec=pltpu.PrefetchScalarGridSpec(
            num_scalar_prefetch=0,
            grid=(num_shards, bpc),
            in_specs=[
                pl.BlockSpec((tm_eff, w), in_map),
                pl.BlockSpec((tm_eff, w), in_map),
            ],
            out_specs=pl.BlockSpec((1, 3, 8, w), lambda s, i: (s, 0, 0, 0)),
        ),
        compiler_params=pltpu.CompilerParams(
            dimension_semantics=("parallel", "arbitrary"),
            vmem_limit_bytes=32 * 1024 * 1024,
        ),
    )(x, y)

    # Tiny epilogue in plain JAX: fold core shards + sublanes + lane groups.
    sums = acc.sum(axis=(0, 2))                       # (3, w)
    if fold > 1:
        sums = sums.reshape(3, fold, c).sum(axis=1)   # (3, c)
    inter, xs, ys = sums[0], sums[1], sums[2]
    dice = (2.0 * inter + smooth) / (xs + ys + smooth)
    return 1.0 - jnp.mean(dice)


def dice_loss_ref(inputs, targets, smooth=1.0):
    c = inputs.shape[-1]
    x = inputs.reshape(-1, c).astype(jnp.float32)
    y = targets.reshape(-1, c).astype(jnp.float32)
    inter = (x * y).sum(axis=0)
    dice = (2.0 * inter + smooth) / (x.sum(axis=0) + y.sum(axis=0) + smooth)
    return 1.0 - dice.mean()


if __name__ == "__main__":
    key = jax.random.PRNGKey(0)
    k1, k2, k3, k4 = jax.random.split(key, 4)

    # Small NCHW-like prediction tensor: (batch=2, channels=4, H=16, W=16).
    # The last axis (W=16) plays the role of the class axis, matching the
    # PyTorch view(-1, size(-1)).  Exercises the lane-dense no-pad fast path.
    x = jax.random.uniform(k1, (2, 4, 16, 16), dtype=jnp.float32)
    t = (jax.random.uniform(k2, (2, 4, 16, 16)) > 0.5).astype(jnp.float32)

    loss = jax.block_until_ready(dice_loss(x, t, smooth=1.0))
    ref = dice_loss_ref(x, t, smooth=1.0)
    assert jnp.allclose(loss, ref, rtol=1e-5, atol=1e-5), (loss, ref)

    # Ragged shape (element count not a multiple of the lane fold): stays on
    # the lane-dense path via zero padding + in-kernel row-tail masking.
    x2 = jax.random.uniform(k3, (3, 5, 7, 16), dtype=jnp.float32)
    t2 = (jax.random.uniform(k4, (3, 5, 7, 16)) > 0.5).astype(jnp.float32)
    loss2 = jax.block_until_ready(dice_loss(x2, t2, smooth=1.0))
    ref2 = dice_loss_ref(x2, t2, smooth=1.0)
    assert jnp.allclose(loss2, ref2, rtol=1e-5, atol=1e-5), (loss2, ref2)

    print("KERNEL_OK")
</pallas_src>

<mosaic_0001>
module attributes {stable_mosaic.version = 11 : i64} {
  func.func @_dice_accum_kernel(%arg0: i32, %arg1: i32, %arg2: memref<16x128xf32, #tpu.memory_space<vmem>>, %arg3: memref<16x128xf32, #tpu.memory_space<vmem>>, %arg4: memref<1x3x8x128xf32, #tpu.memory_space<vmem>>) attributes {dimension_semantics = [#tpu.dimension_semantics<parallel>, #tpu.dimension_semantics<arbitrary>], iteration_bounds = array<i64: 1, 1>, scalar_prefetch = 0 : i64, scratch_operands = 0 : i64, tpu.core_type = #tpu.core_type<tc>, window_params = [{transform_indices = @transform_0, window_bounds = array<i64: 16, 128>}, {transform_indices = @transform_1, window_bounds = array<i64: 16, 128>}, {transform_indices = @transform_2, window_bounds = array<i64: 1, 3, 8, 128>}]} {
    %c0_i32 = arith.constant 0 : i32
    %0 = arith.cmpi eq, %arg1, %c0_i32 : i32
    %1 = arith.extui %0 : i1 to i32
    %c0_i32_0 = arith.constant 0 : i32
    %2 = arith.cmpi ne, %1, %c0_i32_0 : i32
    scf.if %2 {
      %cst_28 = arith.constant 0.000000e+00 : f32
      %29 = vector.broadcast %cst_28 : f32 to vector<1x3x8x128xf32>
      %c0_29 = arith.constant 0 : index
      %c0_30 = arith.constant 0 : index
      %c0_31 = arith.constant 0 : index
      %c0_32 = arith.constant 0 : index
      %30 = vector.load %arg4[%c0_29, %c0_30, %c0_31, %c0_32] : memref<1x3x8x128xf32, #tpu.memory_space<vmem>>, vector<1x3x8x128xf32>
      tpu.vector_store %arg4[%c0_29, %c0_30, %c0_31, %c0_32], %29 {strides = array<i32>} : memref<1x3x8x128xf32, #tpu.memory_space<vmem>>, vector<1x3x8x128xf32>,
    } else {
    }
    %c0 = arith.constant 0 : index
    %c0_1 = arith.constant 0 : index
    %3 = vector.load %arg2[%c0, %c0_1] : memref<16x128xf32, #tpu.memory_space<vmem>>, vector<16x128xf32>
    %c0_2 = arith.constant 0 : index
    %c0_3 = arith.constant 0 : index
    %4 = vector.load %arg3[%c0_2, %c0_3] : memref<16x128xf32, #tpu.memory_space<vmem>>, vector<16x128xf32>
    %5 = vector.shape_cast %3 : vector<16x128xf32> to vector<2x8x128xf32>
    %6 = vector.shape_cast %4 : vector<16x128xf32> to vector<2x8x128xf32>
    %7 = arith.mulf %5, %6 : vector<2x8x128xf32>
    %c0_4 = arith.constant 0 : index
    %c0_5 = arith.constant 0 : index
    %c0_6 = arith.constant 0 : index
    %c0_7 = arith.constant 0 : index
    %8 = vector.load %arg4[%c0_4, %c0_5, %c0_6, %c0_7] : memref<1x3x8x128xf32, #tpu.memory_space<vmem>>, vector<1x1x8x128xf32>
    %9 = vector.shape_cast %8 : vector<1x1x8x128xf32> to vector<8x128xf32>
    %cst = arith.constant dense<0.000000e+00> : vector<8x128xf32>
    %10 = vector.multi_reduction <add>, %7, %cst [0] : vector<2x8x128xf32> to vector<8x128xf32>
    %11 = arith.addf %9, %10 : vector<8x128xf32>
    %c0_8 = arith.constant 0 : index
    %c0_9 = arith.constant 0 : index
    %c0_10 = arith.constant 0 : index
    %c0_11 = arith.constant 0 : index
    %12 = vector.load %arg4[%c0_8, %c0_9, %c0_10, %c0_11] : memref<1x3x8x128xf32, #tpu.memory_space<vmem>>, vector<1x1x8x128xf32>
    %13 = vector.shape_cast %12 : vector<1x1x8x128xf32> to vector<8x128xf32>
    %14 = vector.shape_cast %11 : vector<8x128xf32> to vector<1x1x8x128xf32>
    tpu.vector_store %arg4[%c0_8, %c0_9, %c0_10, %c0_11], %14 {strides = array<i32>} : memref<1x3x8x128xf32, #tpu.memory_space<vmem>>, vector<1x1x8x128xf32>,
    %c0_12 = arith.constant 0 : index
    %c1 = arith.constant 1 : index
    %c0_13 = arith.constant 0 : index
    %c0_14 = arith.constant 0 : index
    %15 = vector.load %arg4[%c0_12, %c1, %c0_13, %c0_14] : memref<1x3x8x128xf32, #tpu.memory_space<vmem>>, vector<1x1x8x128xf32>
    %16 = vector.shape_cast %15 : vector<1x1x8x128xf32> to vector<8x128xf32>
    %cst_15 = arith.constant dense<0.000000e+00> : vector<8x128xf32>
    %17 = vector.multi_reduction <add>, %5, %cst_15 [0] : vector<2x8x128xf32> to vector<8x128xf32>
    %18 = arith.addf %16, %17 : vector<8x128xf32>
    %c0_16 = arith.constant 0 : index
    %c1_17 = arith.constant 1 : index
    %c0_18 = arith.constant 0 : index
    %c0_19 = arith.constant 0 : index
    %19 = vector.load %arg4[%c0_16, %c1_17, %c0_18, %c0_19] : memref<1x3x8x128xf32, #tpu.memory_space<vmem>>, vector<1x1x8x128xf32>
    %20 = vector.shape_cast %19 : vector<1x1x8x128xf32> to vector<8x128xf32>
    %21 = vector.shape_cast %18 : vector<8x128xf32> to vector<1x1x8x128xf32>
    tpu.vector_store %arg4[%c0_16, %c1_17, %c0_18, %c0_19], %21 {strides = array<i32>} : memref<1x3x8x128xf32, #tpu.memory_space<vmem>>, vector<1x1x8x128xf32>,
    %c0_20 = arith.constant 0 : index
    %c2 = arith.constant 2 : index
    %c0_21 = arith.constant 0 : index
    %c0_22 = arith.constant 0 : index
    %22 = vector.load %arg4[%c0_20, %c2, %c0_21, %c0_22] : memref<1x3x8x128xf32, #tpu.memory_space<vmem>>, vector<1x1x8x128xf32>
    %23 = vector.shape_cast %22 : vector<1x1x8x128xf32> to vector<8x128xf32>
    %cst_23 = arith.constant dense<0.000000e+00> : vector<8x128xf32>
    %24 = vector.multi_reduction <add>, %6, %cst_23 [0] : vector<2x8x128xf32> to vector<8x128xf32>
    %25 = arith.addf %23, %24 : vector<8x128xf32>
    %c0_24 = arith.constant 0 : index
    %c2_25 = arith.constant 2 : index
    %c0_26 = arith.constant 0 : index
    %c0_27 = arith.constant 0 : index
    %26 = vector.load %arg4[%c0_24, %c2_25, %c0_26, %c0_27] : memref<1x3x8x128xf32, #tpu.memory_space<vmem>>, vector<1x1x8x128xf32>
    %27 = vector.shape_cast %26 : vector<1x1x8x128xf32> to vector<8x128xf32>
    %28 = vector.shape_cast %25 : vector<8x128xf32> to vector<1x1x8x128xf32>
    tpu.vector_store %arg4[%c0_24, %c2_25, %c0_26, %c0_27], %28 {strides = array<i32>} : memref<1x3x8x128xf32, #tpu.memory_space<vmem>>, vector<1x1x8x128xf32>,
    return
  }
  func.func @transform_0(%arg0: i32, %arg1: i32) -> (i32, i32) {
    %c1_i32 = arith.constant 1 : i32
    %0 = arith.muli %arg0, %c1_i32 : i32
    %1 = arith.addi %0, %arg1 : i32
    %c0_i32 = arith.constant 0 : i32
    %2 = arith.minsi %1, %c0_i32 : i32
    %c0_i32_0 = arith.constant 0 : i32
    %c0_i32_1 = arith.constant 0 : i32
    return %2, %c0_i32_0 : i32, i32
  }
  func.func @transform_1(%arg0: i32, %arg1: i32) -> (i32, i32) {
    %c1_i32 = arith.constant 1 : i32
    %0 = arith.muli %arg0, %c1_i32 : i32
    %1 = arith.addi %0, %arg1 : i32
    %c0_i32 = arith.constant 0 : i32
    %2 = arith.minsi %1, %c0_i32 : i32
    %c0_i32_0 = arith.constant 0 : i32
    %c0_i32_1 = arith.constant 0 : i32
    return %2, %c0_i32_0 : i32, i32
  }
  func.func @transform_2(%arg0: i32, %arg1: i32) -> (i32, i32, i32, i32) {
    %c0_i32 = arith.constant 0 : i32
    %c0_i32_0 = arith.constant 0 : i32
    %c0_i32_1 = arith.constant 0 : i32
    %c0_i32_2 = arith.constant 0 : i32
    return %arg0, %c0_i32, %c0_i32_0, %c0_i32_1 : i32, i32, i32, i32
  }
}

</mosaic_0001>

<llo_original>
// kernel: tpu_custom_call.1
$region0: #{tpu_custom_call.1}
  #allocation0 [shape = 'u32[]', space=smem, size = 0x4, offset = 0x4, fixed_abs, tag = 'smem constant byte address 0x4 - core index']
  #allocation1 [shape = 'u32[72,128]{1,0:T(1,128)}', space=vmem, size = 0x9000, scoped, tag = 'internal scratch']
  %s0 = inlined_call_operand.hbm [shape: f32[16,128], index: 0, kind: input, shape index: {}]
  %s1 = inlined_call_operand.hbm [shape: f32[16,128], index: 1, kind: input, shape index: {}]
  %s2 = inlined_call_operand.hbm [shape: f32[1,3,8,128], index: 2, kind: output, shape index: {}]
  %s3 = sld [smem:[#allocation0]]
  $region30: #{tpu_custom_call.1} parent=0
    _
  %s5 = ssub.s32 1, %s3
  %s6 = scalar_select 0, %s5, %s3
  $region1: #{tpu_custom_call.1} parent=0
    #allocation2 [shape = 'u8[8192]{0}', space=vmem, size = 0x2000, scoped, tag = 'input window, operand 0, single buffered']
    #allocation3 [shape = 's32[1]{0}', space=sflag, size = 0x4, scoped, tag = 'scoped memory for tpu_custom_call.1']
    #allocation4 [shape = 's32[1]{0}', space=sflag, size = 0x4, scoped, tag = 'scoped memory for tpu_custom_call.1']
    #allocation5 [shape = 'u8[8192]{0}', space=vmem, size = 0x2000, scoped, tag = 'input window, operand 1, single buffered']
    #allocation6 [shape = 's32[1]{0}', space=sflag, size = 0x4, scoped, tag = 'scoped memory for tpu_custom_call.1']
    #allocation7 [shape = 'u8[12288]{0}', space=vmem, size = 0x3000, scoped, tag = 'output window, operand 0, single buffered']
    %7 = vsyncpa [#allocation3], 0
    %8 = vsyncpa [#allocation6], 0
    %9 = vsyncpa [#allocation4], 0
    // Predicated region
    $region2: #{tpu_custom_call.1} parent=1 // pred_check
      _
    $region3: #{tpu_custom_call.1} parent=1 // pred_check_branch
      %11 = sbr.rel (0) target = $region5
    $region4: #{tpu_custom_call.1} parent=1 // pred_region
      %s12 = sadd.s32 0, 0
      %p13 = scmp.lt.s32.totalorder %s12, 0
      %s14 = scalar_select %p13, %s12, 0
      %s15 = smul.u32 2, %s14
      %17 = vsyncadd [#allocation3], 0
      %s18 = smul.addr %s15, 8
      %s19 = scalar_lea.hbm %s0, %s18
      %s20 = sshll.u32 %s19, 4
      %s21 = int_to_ptr.hbm [resolvable:$true] %s20
      %s22 = sshll.u32 [#allocation2], 4
      %s23 = int_to_ptr.vmem [resolvable:$true] %s22
      %28 = dma.hbm_to_vmem [thread:$0]  %s21, 256, %s23, [#allocation3], 128, 128, 8
    $region5: #{tpu_custom_call.1} parent=1 // pred_fallthru
      _
    // Predicated region
    $region6: #{tpu_custom_call.1} parent=1 // pred_check
      _
    $region7: #{tpu_custom_call.1} parent=1 // pred_check_branch
      %30 = sbr.rel (0) target = $region9
    $region8: #{tpu_custom_call.1} parent=1 // pred_region
      %s31 = sadd.s32 0, 0
      %p32 = scmp.lt.s32.totalorder %s31, 0
      %s33 = scalar_select %p32, %s31, 0
      %s34 = smul.u32 2, %s33
      %36 = vsyncadd [#allocation6], 0
      %s37 = smul.addr %s34, 8
      %s38 = scalar_lea.hbm %s1, %s37
      %s39 = sshll.u32 %s38, 4
      %s40 = int_to_ptr.hbm [resolvable:$true] %s39
      %s41 = sshll.u32 [#allocation5], 4
      %s42 = int_to_ptr.vmem [resolvable:$true] %s41
      %47 = dma.hbm_to_vmem [thread:$0]  %s40, 256, %s42, [#allocation6], 128, 128, 8
    $region9: #{tpu_custom_call.1} parent=1 // pred_fallthru
      _
    // Predicated region
    $region10: #{tpu_custom_call.1} parent=1 // pred_check
      _
    $region11: #{tpu_custom_call.1} parent=1 // pred_check_branch
      %49 = sbr.rel (0) target = $region13
    $region12: #{tpu_custom_call.1} parent=1 // pred_region
      %51 = dma.done [#allocation3], 256
    $region13: #{tpu_custom_call.1} parent=1 // pred_fallthru
      _
    // Predicated region
    $region14: #{tpu_custom_call.1} parent=1 // pred_check
      _
    $region15: #{tpu_custom_call.1} parent=1 // pred_check_branch
      %53 = sbr.rel (0) target = $region17
    $region16: #{tpu_custom_call.1} parent=1 // pred_region
      %55 = dma.done [#allocation6], 256
    $region17: #{tpu_custom_call.1} parent=1 // pred_fallthru
      _
    %s56 = sadd.s32 0, 0
    %p57 = scmp.lt.s32.totalorder %s56, 0
    %s58 = scalar_select %p57, %s56, 0
    %s59 = smul.u32 2, %s58
    %s60 = sadd.s32 0, 0
    %p61 = scmp.lt.s32.totalorder %s60, 0
    %s62 = scalar_select %p61, %s60, 0
    %s63 = smul.u32 2, %s62
    %p64 = scmp.eq.s32.totalorder 0, 0
    // Predicated region
    $region18: #{tpu_custom_call.1} parent=1 // pred_check
      %p65 = pneg %p64
    $region19: #{tpu_custom_call.1} parent=1 // pred_check_branch
      %67 = sbr.rel (%p65) target = $region21
    $region20: #{tpu_custom_call.1} parent=1 // pred_region
      %68 = vst [vmem:[#allocation7] sm:$0xff] 0.0
      %69 = vst [vmem:[#allocation7 + $0x8] sm:$0xff] 0.0
      %70 = vst [vmem:[#allocation7 + $0x10] sm:$0xff] 0.0
    $region21: #{tpu_custom_call.1} parent=1 // pred_fallthru
      _
    %v71 = vld [vmem:[#allocation2] sm:$0xff]
    %v72 = vld [vmem:[#allocation2 + $0x8] sm:$0xff]
    %v73 = vld [vmem:[#allocation5] sm:$0xff]
    %v74 = vld [vmem:[#allocation5 + $0x8] sm:$0xff]
    %v75 = vmul.f32 %v71, %v73
    %v76 = vmul.f32 %v72, %v74
    %v77 = vld [vmem:[#allocation7] sm:$0xff]
    %v78 = vadd.f32 %v75, %v76
    %v79 = vadd.f32 %v77, %v78
    %80 = vst [vmem:[#allocation7] sm:$0xff] %v79
    %s81 = scalar_lea.vmem [#allocation7], 8
    %v82 = vld [vmem:[%s81] sm:$0xff]
    %v83 = vadd.f32 %v71, %v72
    %v84 = vadd.f32 %v82, %v83
    %85 = vst [vmem:[%s81] sm:$0xff] %v84
    %s86 = scalar_lea.vmem [#allocation7], 16
    %v87 = vld [vmem:[%s86] sm:$0xff]
    %v88 = vadd.f32 %v73, %v74
    %v89 = vadd.f32 %v87, %v88
    %90 = vst [vmem:[%s86] sm:$0xff] %v89
    // Predicated region
    $region22: #{tpu_custom_call.1} parent=1 // pred_check
      _
    $region23: #{tpu_custom_call.1} parent=1 // pred_check_branch
      %92 = sbr.rel (0) target = $region25
    $region24: #{tpu_custom_call.1} parent=1 // pred_region
      %94 = vsyncadd [#allocation4], 0
      %s95 = sshll.u32 [#allocation7], 4
      %s96 = int_to_ptr.vmem [resolvable:$true] %s95
      %s97 = sshll.u32 %s2, 4
      %s98 = int_to_ptr.hbm [resolvable:$true] %s97
      %103 = dma.vmem_to_hbm [thread:$0]  %s96, 384, %s98, [#allocation4], 128, 128, 8
    $region25: #{tpu_custom_call.1} parent=1 // pred_fallthru
      _
    // Predicated region
    $region26: #{tpu_custom_call.1} parent=1 // pred_check
      _
    $region27: #{tpu_custom_call.1} parent=1 // pred_check_branch
      %105 = sbr.rel (0) target = $region29
    $region28: #{tpu_custom_call.1} parent=1 // pred_region
      %107 = dma.done [#allocation4], 384
    $region29: #{tpu_custom_call.1} parent=1 // pred_fallthru
      _
    %108 = vsyncpa [#allocation3], 1
    %109 = vsyncpa [#allocation6], 1
    %110 = vsyncpa [#allocation4], 1

</llo_original>
